<compile_context>
chip_gen: v7x
topology: tpu7x:2x2x1
jax: 0.10.0
libtpu: 0.0.40
codegen_flags: <defaults>
</compile_context>

<pallas_src>
import jax
import jax.numpy as jnp
import numpy as np
from jax.experimental import pallas as pl
from jax.experimental.pallas import tpu as pltpu


def _round_up(x, m):
    return (x + m - 1) // m * m


def _sublane_multiple(dtype):
    itemsize = jnp.dtype(dtype).itemsize
    if itemsize >= 4:
        return 8
    if itemsize == 2:
        return 16
    return 32


def _vmem_cap_bytes():
    # ~3/4 of physical VMEM, additionally capped at 96 MiB:
    # -> ~48 MiB on v7x (64 MiB phys), ~96 MiB on v5e/v6e (128 MiB phys).
    try:
        phys = int(pltpu.get_tpu_info().vmem_capacity_bytes)
    except Exception:
        phys = 64 << 20  # conservative (v7x-sized) fallback
    return min((phys // 4) * 3, 96 << 20)


# --------------------- Stage 1: t = h @ down.T  (M, rank_p), f32 -------------
def _lora_down_kernel(h_ref, down_t_ref, t_ref):
    # Accumulate directly in the f32 output block; it stays VMEM-resident
    # across the k axis because its block index ignores k.
    @pl.when(pl.program_id(1) == 0)
    def _():
        t_ref[...] = jnp.zeros_like(t_ref)

    t_ref[...] += jnp.dot(h_ref[...], down_t_ref[...],
                          preferred_element_type=jnp.float32)


# ------------- Stage 2: y = h @ org_w.T + t @ up.T + bias  (M, out) ----------
def _lora_linear_kernel(h_ref, w_t_ref, t_ref, up_t_ref, bias_ref,
                        o_ref, acc_ref):
    k = pl.program_id(2)

    # Fold the low-rank correction and bias into the accumulator init: no
    # (tm, tn) zero-fill, and the extra MXU work is off the final-k tail.
    @pl.when(k == 0)
    def _():
        acc_ref[...] = (jnp.dot(t_ref[...], up_t_ref[...],
                                preferred_element_type=jnp.float32)
                        + bias_ref[...])

    acc_ref[...] += jnp.dot(h_ref[...], w_t_ref[...],
                            preferred_element_type=jnp.float32)

    @pl.when(k == pl.num_programs(2) - 1)
    def _():
        o_ref[...] = acc_ref[...].astype(o_ref.dtype)


class LoRALinearParams:
    """Padded / pre-transposed static parameters (built once, reused)."""

    def __init__(self, w_t, down_t, up_t, bias, out_features, tn, tk):
        self.w_t = w_t              # (k_p, n_p)     activation dtype
        self.down_t = down_t        # (k_p, rank_p)  activation dtype
        self.up_t = up_t            # (rank_p, n_p)  float32
        self.bias = bias            # (1, n_p)       float32
        self.out_features = out_features
        self.tn = tn
        self.tk = tk

    @property
    def k_p(self):
        return self.w_t.shape[0]

    @property
    def n_p(self):
        return self.w_t.shape[1]

    @property
    def rank_p(self):
        return self.up_t.shape[0]


def prepare_lora_linear(org_weight, org_bias, up_weight, down_weight, dtype,
                        *, tn=512, tk=1024):
    """Pad + transpose the static parameters once (hoisted out of the forward).

    org_weight: (out, in), org_bias: (out,) or None,
    up_weight: (out, rank), down_weight: (rank, in).
    """
    out_features, in_features = org_weight.shape
    rank = down_weight.shape[0]

    tn = min(tn, _round_up(out_features, 128))
    tk = min(tk, _round_up(in_features, 128))
    rank_p = _round_up(rank, 128)
    n_p = _round_up(out_features, tn)
    k_p = _round_up(in_features, tk)

    def pad2(x, rows, cols):
        return jnp.pad(x, ((0, rows - x.shape[0]), (0, cols - x.shape[1])))

    # Canonical (K, N) layouts -> plain row-major matmuls, no in-kernel
    # transposes. MXU operands are fed in the activation dtype (bf16-native
    # on v6e/v7x when the model runs bf16); accumulation is f32.
    w_t = pad2(org_weight.astype(dtype).T, k_p, n_p)            # (k_p, n_p)
    down_t = pad2(down_weight.astype(dtype).T, k_p, rank_p)     # (k_p, rank_p)
    up_t = pad2(up_weight.astype(jnp.float32).T, rank_p, n_p)   # (rank_p, n_p)
    if org_bias is None:
        bias = jnp.zeros((1, n_p), jnp.float32)
    else:
        bias = pad2(org_bias.astype(jnp.float32).reshape(1, -1), 1, n_p)

    return LoRALinearParams(w_t, down_t, up_t, bias, out_features, tn, tk)


def lora_linear_forward(h, params, *, tm=512):
    """h: (..., in_features) -> (..., out_features), using prepared params."""
    lead = h.shape[:-1]
    in_features = h.shape[-1]
    m = int(np.prod(lead)) if lead else 1
    dtype = h.dtype
    sub = _sublane_multiple(dtype)

    k_p, n_p, rank_p = params.k_p, params.n_p, params.rank_p
    tn, tk = params.tn, params.tk
    tm = min(tm, _round_up(m, sub))

    # v7x megacore: make sure the stage-2 "parallel" grid has >= 2 blocks.
    if (_round_up(m, tm) // tm) * (n_p // tn) == 1:
        if tn // 2 >= 128 and (tn // 2) % 128 == 0 and n_p % (tn // 2) == 0:
            tn //= 2
        elif tm // 2 >= sub and (tm // 2) % sub == 0:
            tm //= 2

    m_p = _round_up(m, tm)

    itemsize = jnp.dtype(dtype).itemsize
    vmem_cap = _vmem_cap_bytes()

    def tile_bytes(tm_, tn_, tk_):
        # double-buffered inputs + double-buffered output + f32 accumulator
        ins = (itemsize * (tm_ * tk_ + tk_ * tn_)
               + 4 * (tm_ * rank_p + rank_p * tn_ + tn_))
        return 2 * ins + 2 * itemsize * tm_ * tn_ + 4 * tm_ * tn_

    # Shrink tk (then tn) if the chosen tiling would exceed the VMEM cap.
    while (tile_bytes(tm, tn, tk) > vmem_cap and tk // 2 >= 128
           and (tk // 2) % 128 == 0 and k_p % (tk // 2) == 0):
        tk //= 2
    while (tile_bytes(tm, tn, tk) > vmem_cap and tn // 2 >= 128
           and (tn // 2) % 128 == 0 and n_p % (tn // 2) == 0):
        tn //= 2

    h2d = h.reshape(m, in_features)
    if (m, in_features) != (m_p, k_p):   # pad activations only when needed
        h2d = jnp.pad(h2d, ((0, m_p - m), (0, k_p - in_features)))

    n_k = k_p // tk

    # ---- Stage 1: LoRA down projection (tiny, f32 output) ----------------
    t = pl.pallas_call(
        _lora_down_kernel,
        out_shape=jax.ShapeDtypeStruct((m_p, rank_p), jnp.float32),
        grid_spec=pltpu.PrefetchScalarGridSpec(
            num_scalar_prefetch=0,
            grid=(m_p // tm, n_k),
            in_specs=[
                pl.BlockSpec((tm, tk), lambda i, k: (i, k)),       # h
                pl.BlockSpec((tk, rank_p), lambda i, k: (k, 0)),   # down.T
            ],
            out_specs=pl.BlockSpec((tm, rank_p), lambda i, k: (i, 0)),
        ),
        compiler_params=pltpu.CompilerParams(
            dimension_semantics=("parallel", "arbitrary")),
    )(h2d, params.down_t)

    # ---- Stage 2: dense path + low-rank correction + bias -----------------
    flops = 2 * m_p * k_p * n_p + 2 * m_p * rank_p * n_p
    bytes_accessed = (itemsize * (m_p * k_p + k_p * n_p + m_p * n_p)
                      + 4 * (m_p * rank_p + rank_p * n_p + n_p))
    cost = pl.CostEstimate(flops=flops, transcendentals=0,
                           bytes_accessed=bytes_accessed)
    vmem_limit = int(min(max(tile_bytes(tm, tn, tk) + (8 << 20), 32 << 20),
                         vmem_cap))

    out_pad = pl.pallas_call(
        _lora_linear_kernel,
        out_shape=jax.ShapeDtypeStruct((m_p, n_p), dtype),
        grid_spec=pltpu.PrefetchScalarGridSpec(
            num_scalar_prefetch=0,
            grid=(m_p // tm, n_p // tn, n_k),
            in_specs=[
                pl.BlockSpec((tm, tk), lambda i, j, k: (i, k)),        # h
                pl.BlockSpec((tk, tn), lambda i, j, k: (k, j)),        # org_w.T
                pl.BlockSpec((tm, rank_p), lambda i, j, k: (i, 0)),    # t (f32)
                pl.BlockSpec((rank_p, tn), lambda i, j, k: (0, j)),    # up.T
                pl.BlockSpec((1, tn), lambda i, j, k: (0, j)),         # bias
            ],
            out_specs=pl.BlockSpec((tm, tn), lambda i, j, k: (i, j)),
            scratch_shapes=[pltpu.VMEM((tm, tn), jnp.float32)],
        ),
        compiler_params=pltpu.CompilerParams(
            dimension_semantics=("parallel", "parallel", "arbitrary"),
            vmem_limit_bytes=vmem_limit),
        cost_estimate=cost,
    )(h2d, params.w_t, t, params.up_t, params.bias)

    out = out_pad[:m, :params.out_features]
    return out.reshape(*lead, params.out_features)


if __name__ == "__main__":
    # Small deterministic example consistent with the module's forward:
    # h: (batch=2, seq=8, in_features=32); org Linear(32 -> 32, bias);
    # LoRA rank=256 (module default).
    batch, seq = 2, 8
    in_features, out_features, rank = 32, 32, 256
    dtype = jnp.float32

    key = jax.random.PRNGKey(0)
    k_h, k_orgw, k_orgb, k_up, k_down = jax.random.split(key, 5)

    h = jax.random.normal(k_h, (batch, seq, in_features), dtype=dtype)
    org_weight = jax.random.normal(k_orgw, (out_features, in_features),
                                   dtype=dtype) * 0.05
    org_bias = jax.random.normal(k_orgb, (out_features,), dtype=dtype) * 0.05
    up_weight = jax.random.normal(k_up, (out_features, rank), dtype=dtype) * 0.02
    down_weight = jax.random.normal(k_down, (rank, in_features), dtype=dtype) * 0.02

    # Static parameters prepared once (hoisted out of the per-call path).
    params = prepare_lora_linear(org_weight, org_bias, up_weight, down_weight,
                                 dtype)

    out = lora_linear_forward(h, params)
    out = jax.block_until_ready(out)

    # NumPy (f64) reference for correctness.
    h_np = np.asarray(h, dtype=np.float64)
    w_np = np.asarray(org_weight, dtype=np.float64)
    up_np = np.asarray(up_weight, dtype=np.float64)
    dn_np = np.asarray(down_weight, dtype=np.float64)
    b_np = np.asarray(org_bias, dtype=np.float64)
    final_w = w_np + up_np @ dn_np
    ref = h_np @ final_w.T + b_np
    np.testing.assert_allclose(np.asarray(out, dtype=np.float64), ref,
                               rtol=1e-4, atol=1e-4)

    print("KERNEL_OK")
</pallas_src>

<mosaic_0001>
module attributes {stable_mosaic.version = 11 : i64} {
  func.func @_lora_down_kernel(%arg0: i32, %arg1: i32, %arg2: memref<8x128xf32, #tpu.memory_space<vmem>>, %arg3: memref<128x256xf32, #tpu.memory_space<vmem>>, %arg4: memref<8x256xf32, #tpu.memory_space<vmem>>) attributes {dimension_semantics = [#tpu.dimension_semantics<parallel>, #tpu.dimension_semantics<arbitrary>], iteration_bounds = array<i64: 2, 1>, scalar_prefetch = 0 : i64, scratch_operands = 0 : i64, tpu.core_type = #tpu.core_type<tc>, window_params = [{transform_indices = @transform_0, window_bounds = array<i64: 8, 128>}, {transform_indices = @transform_1, window_bounds = array<i64: 128, 256>}, {transform_indices = @transform_2, window_bounds = array<i64: 8, 256>}]} {
    %c0_i32 = arith.constant 0 : i32
    %0 = arith.cmpi eq, %arg1, %c0_i32 : i32
    %1 = arith.extui %0 : i1 to i32
    %c0_i32_0 = arith.constant 0 : i32
    %2 = arith.cmpi ne, %1, %c0_i32_0 : i32
    scf.if %2 {
      %cst_8 = arith.constant 0.000000e+00 : f32
      %9 = vector.broadcast %cst_8 : f32 to vector<8x256xf32>
      %c0_9 = arith.constant 0 : index
      %c0_10 = arith.constant 0 : index
      %10 = vector.load %arg4[%c0_9, %c0_10] : memref<8x256xf32, #tpu.memory_space<vmem>>, vector<8x256xf32>
      tpu.vector_store %arg4[%c0_9, %c0_10], %9 {strides = array<i32>} : memref<8x256xf32, #tpu.memory_space<vmem>>, vector<8x256xf32>,
    } else {
    }
    %c0 = arith.constant 0 : index
    %c0_1 = arith.constant 0 : index
    %3 = vector.load %arg4[%c0, %c0_1] : memref<8x256xf32, #tpu.memory_space<vmem>>, vector<8x256xf32>
    %c0_2 = arith.constant 0 : index
    %c0_3 = arith.constant 0 : index
    %4 = vector.load %arg2[%c0_2, %c0_3] : memref<8x128xf32, #tpu.memory_space<vmem>>, vector<8x128xf32>
    %c0_4 = arith.constant 0 : index
    %c0_5 = arith.constant 0 : index
    %5 = vector.load %arg3[%c0_4, %c0_5] : memref<128x256xf32, #tpu.memory_space<vmem>>, vector<128x256xf32>
    %cst = arith.constant dense<0.000000e+00> : vector<8x256xf32>
    %6 = tpu.matmul %4, %5, %cst {dimension_numbers = #tpu.dot_dimension_numbers<[1], [0], [0], [1], [0, 0, 1, 1], [], []>} : vector<8x128xf32>, vector<128x256xf32>, vector<8x256xf32> -> vector<8x256xf32>
    %7 = arith.addf %3, %6 : vector<8x256xf32>
    %c0_6 = arith.constant 0 : index
    %c0_7 = arith.constant 0 : index
    %8 = vector.load %arg4[%c0_6, %c0_7] : memref<8x256xf32, #tpu.memory_space<vmem>>, vector<8x256xf32>
    tpu.vector_store %arg4[%c0_6, %c0_7], %7 {strides = array<i32>} : memref<8x256xf32, #tpu.memory_space<vmem>>, vector<8x256xf32>,
    return
  }
  func.func @transform_0(%arg0: i32, %arg1: i32) -> (i32, i32) {
    %c0_i32 = arith.constant 0 : i32
    return %arg0, %arg1 : i32, i32
  }
  func.func @transform_1(%arg0: i32, %arg1: i32) -> (i32, i32) {
    %c0_i32 = arith.constant 0 : i32
    %c0_i32_0 = arith.constant 0 : i32
    return %arg1, %c0_i32 : i32, i32
  }
  func.func @transform_2(%arg0: i32, %arg1: i32) -> (i32, i32) {
    %c0_i32 = arith.constant 0 : i32
    %c0_i32_0 = arith.constant 0 : i32
    return %arg0, %c0_i32 : i32, i32
  }
}

</mosaic_0001>

<llo_original>
// kernel: tpu_custom_call.1
$region0: #{tpu_custom_call.1}
  #allocation0 [shape = 'u32[]', space=smem, size = 0x4, offset = 0x4, fixed_abs, tag = 'smem constant byte address 0x4 - core index']
  #allocation1 [shape = 'u32[144,128]{1,0:T(1,128)}', space=vmem, size = 0x12000, scoped, tag = 'internal scratch']
  %s0 = inlined_call_operand.hbm [shape: f32[16,128], index: 0, kind: input, shape index: {}]
  %s1 = inlined_call_operand.hbm [shape: f32[128,256], index: 1, kind: input, shape index: {}]
  %s2 = inlined_call_operand.hbm [shape: f32[16,256], index: 2, kind: output, shape index: {}]
  %s3 = sld [smem:[#allocation0]]
  $region53: #{tpu_custom_call.1} parent=0
    _
  %s5 = ssub.s32 1, %s3
  %s6 = scalar_select 0, %s5, %s3
  $region1: #{tpu_custom_call.1} parent=0
    #allocation2 [shape = 'u8[8192]{0}', space=vmem, size = 0x2000, scoped, tag = 'input window, operand 0']
    #allocation3 [shape = 's32[2]{0}', space=sflag, size = 0x8, scoped, tag = 'scoped memory for tpu_custom_call.1']
    #allocation4 [shape = 's32[2]{0}', space=sflag, size = 0x8, scoped, tag = 'scoped memory for tpu_custom_call.1']
    #allocation5 [shape = 'u8[131072]{0}', space=vmem, size = 0x20000, scoped, tag = 'input window, operand 1, single buffered']
    #allocation6 [shape = 's32[1]{0}', space=sflag, size = 0x4, scoped, tag = 'scoped memory for tpu_custom_call.1']
    #allocation7 [shape = 'u8[16384]{0}', space=vmem, size = 0x4000, scoped, tag = 'output window, operand 0']
    %7 = vsyncpa [#allocation3], 0
    %s8 = scalar_lea.sflag [#allocation3], 1
    %9 = vsyncpa %s8, 0
    %10 = vsyncpa [#allocation6], 0
    %11 = vsyncpa [#allocation4], 0
    %s12 = scalar_lea.sflag [#allocation4], 1
    %13 = vsyncpa %s12, 0
    loop: start=0, step=1, limit=4
    $region2: #{tpu_custom_call.1} parent=1 // loop_pre_header
      _
    $region3: #{tpu_custom_call.1} parent=1 // loop_header
      %s15 = sphi 0, %s19
      %p16 = scmp.ge.s32.totalorder %s15, 4
      %s22 = sphi 0, %s34
      %s23 = sphi 0, %s30
      %s24 = sphi 0, %s22
      %s25 = sphi 0, %s23
      %s26 = sphi 0, %s24
      %s27 = sphi 0, %s25
      %s39 = sphi 0, %s41
      %s42 = sphi 0, %s39
      %s43 = sphi 0, %s42
      %s59 = sphi 0, %s43
      %s65 = sphi 0, %s67
      %s68 = sphi 0, %s65
      %s69 = sphi 0, %s68
      %s85 = sphi 0, %s69
      %s91 = sphi 0, %s93
      %s94 = sphi 0, %s91
      %s95 = sphi 0, %s94
      %s111 = sphi 0, %s95
    $region4: #{tpu_custom_call.1} parent=1 // loop_header_branch
      %18 = sbr.rel (%p16) target = $region8
    $region5: #{tpu_custom_call.1} parent=1 // loop_body
      %s20 = ssub.s32 %s15, 1
      %s21 = ssub.s32 %s15, 2
      %s28 = sadd.s32 1, %s23
      %p29 = scmp.ge.s32.totalorder %s28, 1
      %s30 = scalar_select %p29, 0, %s28
      %s31 = sadd.s32 1, %s22
      %s32 = scalar_select %p29, %s31, %s22
      %p33 = scmp.ge.s32.totalorder %s32, 2
      %s34 = scalar_select %p33, 0, %s32
      %s35 = ssub.s32 %s22, %s34
      %s36 = ssub.s32 %s23, %s30
      %s37 = sor.u32 %s35, %s36
      %p38 = scmp.eq.s32.totalorder %s37, 0
      %s40 = sadd.s32 %s39, 1
      %s41 = scalar_select %p38, %s39, %s40
      %p44 = pneg %p38
      %p45 = scmp.eq.s32.totalorder %s15, 1
      %p46 = por %p44, %p45
      %p47 = scmp.ne.s32.totalorder %s39, %s42
      %p48 = scmp.eq.s32.totalorder %s15, 0
      %p49 = por %p47, %p48
      %p50 = scmp.ne.s32.totalorder %s39, %s42
      %p51 = scmp.eq.s32.totalorder %s20, 1
      %p52 = por %p50, %p51
      %p53 = scmp.ne.s32.totalorder %s42, %s43
      %p54 = scmp.eq.s32.totalorder %s20, 0
      %p55 = por %p53, %p54
      %p56 = scmp.ne.s32.totalorder %s42, %s43
      %p57 = scmp.eq.s32.totalorder %s21, 1
      %p58 = por %p56, %p57
      %p60 = scmp.ne.s32.totalorder %s43, %s59
      %p61 = scmp.eq.s32.totalorder %s21, 0
      %p62 = por %p60, %p61
      %s63 = ssub.s32 %s23, %s30
      %p64 = scmp.eq.s32.totalorder %s63, 0
      %s66 = sadd.s32 %s65, 1
      %s67 = scalar_select %p64, %s65, %s66
      %p70 = pneg %p64
      %p71 = scmp.eq.s32.totalorder %s15, 1
      %p72 = por %p70, %p71
      %p73 = scmp.ne.s32.totalorder %s65, %s68
      %p74 = scmp.eq.s32.totalorder %s15, 0
      %p75 = por %p73, %p74
      %p76 = scmp.ne.s32.totalorder %s65, %s68
      %p77 = scmp.eq.s32.totalorder %s20, 1
      %p78 = por %p76, %p77
      %p79 = scmp.ne.s32.totalorder %s68, %s69
      %p80 = scmp.eq.s32.totalorder %s20, 0
      %p81 = por %p79, %p80
      %p82 = scmp.ne.s32.totalorder %s68, %s69
      %p83 = scmp.eq.s32.totalorder %s21, 1
      %p84 = por %p82, %p83
      %p86 = scmp.ne.s32.totalorder %s69, %s85
      %p87 = scmp.eq.s32.totalorder %s21, 0
      %p88 = por %p86, %p87
      %s89 = ssub.s32 %s22, %s34
      %p90 = scmp.eq.s32.totalorder %s89, 0
      %s92 = sadd.s32 %s91, 1
      %s93 = scalar_select %p90, %s91, %s92
      %p96 = pneg %p90
      %p97 = scmp.eq.s32.totalorder %s15, 1
      %p98 = por %p96, %p97
      %p99 = scmp.ne.s32.totalorder %s91, %s94
      %p100 = scmp.eq.s32.totalorder %s15, 0
      %p101 = por %p99, %p100
      %p102 = scmp.ne.s32.totalorder %s91, %s94
      %p103 = scmp.eq.s32.totalorder %s20, 1
      %p104 = por %p102, %p103
      %p105 = scmp.ne.s32.totalorder %s94, %s95
      %p106 = scmp.eq.s32.totalorder %s20, 0
      %p107 = por %p105, %p106
      %p108 = scmp.ne.s32.totalorder %s94, %s95
      %p109 = scmp.eq.s32.totalorder %s21, 1
      %p110 = por %p108, %p109
      %p112 = scmp.ne.s32.totalorder %s95, %s111
      %p113 = scmp.eq.s32.totalorder %s21, 0
      %p114 = por %p112, %p113
      %p115 = scmp.le.s32.totalorder 1, %s15
      %p116 = scmp.lt.s32.totalorder %s15, 3
      %p117 = pnand %p115, %p116
      %p118 = pneg %p117
      // Predicated region
      $region9: #{tpu_custom_call.1} parent=5 // pred_check
        _
      $region10: #{tpu_custom_call.1} parent=5 // pred_check_branch
        %120 = sbr.rel (%p117) target = $region12
      $region11: #{tpu_custom_call.1} parent=5 // pred_region
        %s121 = ssub.s32 %s15, 1
        // Predicated region
        $region13: #{tpu_custom_call.1} parent=11 // pred_check
          %p122 = pneg %p81
        $region14: #{tpu_custom_call.1} parent=11 // pred_check_branch
          %124 = sbr.rel (%p122) target = $region16
        $region15: #{tpu_custom_call.1} parent=11 // pred_region
          %s125 = smul.u32 16, %s25
          %s127 = ssub.s32 4096, 4096
          %128 = vsyncadd [#allocation6], %s127
          %s129 = smul.addr %s125, 2
          %s130 = smul.addr %s129, 128
          %s131 = scalar_lea.hbm %s1, %s130
          %s132 = sshll.u32 [#allocation5], 4
          %s133 = int_to_ptr.vmem [resolvable:$true] %s132
          %138 = dma.hbm_to_vmem [thread:$0]  %s131, 4096, %s133, [#allocation6], 256, 256, 16
        $region16: #{tpu_custom_call.1} parent=11 // pred_fallthru
          _
      $region12: #{tpu_custom_call.1} parent=5 // pred_fallthru
        _
      %p139 = scmp.lt.s32.totalorder %s15, 2
      // Predicated region
      $region17: #{tpu_custom_call.1} parent=5 // pred_check
        %p140 = pneg %p139
      $region18: #{tpu_custom_call.1} parent=5 // pred_check_branch
        %142 = sbr.rel (%p140) target = $region20
      $region19: #{tpu_custom_call.1} parent=5 // pred_region
        // Predicated region
        $region21: #{tpu_custom_call.1} parent=19 // pred_check
          %p143 = pneg %p49
        $region22: #{tpu_custom_call.1} parent=19 // pred_check_branch
          %145 = sbr.rel (%p143) target = $region24
        $region23: #{tpu_custom_call.1} parent=19 // pred_region
          %s146 = sand.u32 %s39, 1
          %s147 = scalar_lea.sflag [#allocation3], %s146
          %s148 = sand.u32 %s39, 1
          %s149 = smul.addr %s148, 8
          %s150 = scalar_lea.vmem [#allocation2], %s149
          %s152 = ssub.s32 128, 128
          %153 = vsyncadd %s147, %s152
          %s154 = sadd.s32 %s23, %s22
          %s155 = smul.addr %s154, 128
          %s156 = scalar_lea.hbm %s0, %s155
          %s158 = sshll.u32 %s150, 4
          %s159 = int_to_ptr.vmem [resolvable:$true] %s158
          %161 = dma.hbm_to_vmem [thread:$0]  %s156, 128, %s159, %s147
        $region24: #{tpu_custom_call.1} parent=19 // pred_fallthru
          _
      $region20: #{tpu_custom_call.1} parent=5 // pred_fallthru
        _
      %p162 = scmp.le.s32.totalorder 1, %s15
      %p163 = scmp.lt.s32.totalorder %s15, 3
      %p164 = pnand %p162, %p163
      %p165 = pneg %p164
      // Predicated region
      $region25: #{tpu_custom_call.1} parent=5 // pred_check
        _
      $region26: #{tpu_custom_call.1} parent=5 // pred_check_branch
        %167 = sbr.rel (%p164) target = $region28
      $region27: #{tpu_custom_call.1} parent=5 // pred_region
        %s168 = ssub.s32 %s15, 1
        %s169 = sand.u32 %s42, 1
        %s170 = scalar_lea.sflag [#allocation3], %s169
        %s171 = sand.u32 %s42, 1
        %s172 = smul.addr %s171, 8
        %s173 = scalar_lea.vmem [#allocation2], %s172
        // Predicated region
        $region29: #{tpu_custom_call.1} parent=27 // pred_check
          %p174 = pneg %p55
        $region30: #{tpu_custom_call.1} parent=27 // pred_check_branch
          %176 = sbr.rel (%p174) target = $region32
        $region31: #{tpu_custom_call.1} parent=27 // pred_region
          %177 = dma.done %s170, 128
        $region32: #{tpu_custom_call.1} parent=27 // pred_fallthru
          _
        // Predicated region
        $region33: #{tpu_custom_call.1} parent=27 // pred_check
          %p178 = pneg %p81
        $region34: #{tpu_custom_call.1} parent=27 // pred_check_branch
          %180 = sbr.rel (%p178) target = $region36
        $region35: #{tpu_custom_call.1} parent=27 // pred_region
          %181 = dma.done [#allocation6], 4096
        $region36: #{tpu_custom_call.1} parent=27 // pred_fallthru
          _
        %s182 = sand.u32 %s42, 1
        %s183 = scalar_lea.sflag [#allocation3], %s182
        %s184 = sand.u32 %s42, 1
        %s185 = smul.addr %s184, 8
        %s186 = scalar_lea.vmem [#allocation2], %s185
        %p187 = pneg %p55
        %p188 = pneg %p52
        %p189 = pneg %p81
        %p190 = pneg %p78
        %p191 = pneg %p107
        %p192 = pneg %p104
        %s193 = sand.u32 %s94, 1
        %s194 = scalar_lea.sflag [#allocation4], %s193
        %s195 = sand.u32 %s94, 1
        %s196 = smul.addr %s195, 16
        %s197 = scalar_lea.vmem [#allocation7], %s196
        %s198 = smul.u32 16, %s25
        %p199 = scmp.eq.s32.totalorder %s25, 0
        // Predicated region
        $region37: #{tpu_custom_call.1} parent=27 // pred_check
          %p200 = pneg %p199
        $region38: #{tpu_custom_call.1} parent=27 // pred_check_branch
          %202 = sbr.rel (%p200) target = $region40
        $region39: #{tpu_custom_call.1} parent=27 // pred_region
          %203 = vst [vmem:[%s197] sm:$0xff] 0.0
          %204 = vst [vmem:[%s197 + $0x8] sm:$0xff] 0.0
        $region40: #{tpu_custom_call.1} parent=27 // pred_fallthru
          _
        %v205 = vld [vmem:[%s197] sm:$0xff]
        %v206 = vld [vmem:[%s197 + $0x8] sm:$0xff]
        %v207 = vld [vmem:[%s173] sm:$0xff]
        %v208 = vld [vmem:[#allocation5] sm:$0xff]
        %v209 = vld [vmem:[#allocation5 + $0x8] sm:$0xff]
        %v210 = vld [vmem:[#allocation5 + $0x10] sm:$0xff]
        %v211 = vld [vmem:[#allocation5 + $0x18] sm:$0xff]
        %v212 = vld [vmem:[#allocation5 + $0x20] sm:$0xff]
        %v213 = vld [vmem:[#allocation5 + $0x28] sm:$0xff]
        %v214 = vld [vmem:[#allocation5 + $0x30] sm:$0xff]
        %v215 = vld [vmem:[#allocation5 + $0x38] sm:$0xff]
        %v216 = vld [vmem:[#allocation5 + $0x40] sm:$0xff]
        %v217 = vld [vmem:[#allocation5 + $0x48] sm:$0xff]
        %v218 = vld [vmem:[#allocation5 + $0x50] sm:$0xff]
        %v219 = vld [vmem:[#allocation5 + $0x58] sm:$0xff]
        %v220 = vld [vmem:[#allocation5 + $0x60] sm:$0xff]
        %v221 = vld [vmem:[#allocation5 + $0x68] sm:$0xff]
        %v222 = vld [vmem:[#allocation5 + $0x70] sm:$0xff]
        %v223 = vld [vmem:[#allocation5 + $0x78] sm:$0xff]
        %v224 = vld [vmem:[#allocation5 + $0x80] sm:$0xff]
        %v225 = vld [vmem:[#allocation5 + $0x88] sm:$0xff]
        %v226 = vld [vmem:[#allocation5 + $0x90] sm:$0xff]
        %v227 = vld [vmem:[#allocation5 + $0x98] sm:$0xff]
        %v228 = vld [vmem:[#allocation5 + $0xa0] sm:$0xff]
        %v229 = vld [vmem:[#allocation5 + $0xa8] sm:$0xff]
        %v230 = vld [vmem:[#allocation5 + $0xb0] sm:$0xff]
        %v231 = vld [vmem:[#allocation5 + $0xb8] sm:$0xff]
        %v232 = vld [vmem:[#allocation5 + $0xc0] sm:$0xff]
        %v233 = vld [vmem:[#allocation5 + $0xc8] sm:$0xff]
        %v234 = vld [vmem:[#allocation5 + $0xd0] sm:$0xff]
        %v235 = vld [vmem:[#allocation5 + $0xd8] sm:$0xff]
        %v236 = vld [vmem:[#allocation5 + $0xe0] sm:$0xff]
        %v237 = vld [vmem:[#allocation5 + $0xe8] sm:$0xff]
        %v238 = vld [vmem:[#allocation5 + $0xf0] sm:$0xff]
        %v239 = vld [vmem:[#allocation5 + $0xf8] sm:$0xff]
        %240 = vmatprep.subr.mxu0 %v209
        %241 = vmatpush1.msra.mxu0 %v208
        %242 = vmatprep.subr.mxu0 %v211
        %243 = vmatpush1.msra.mxu0 %v210
        %244 = vmatprep.subr.mxu0 %v213
        %245 = vmatpush1.msra.mxu0 %v212
        %246 = vmatprep.subr.mxu0 %v215
        %247 = vmatpush1.msra.mxu0 %v214
        %248 = vmatprep.subr.mxu0 %v217
        %249 = vmatpush1.msra.mxu0 %v216
        %250 = vmatprep.subr.mxu0 %v219
        %251 = vmatpush1.msra.mxu0 %v218
        %252 = vmatprep.subr.mxu0 %v221
        %253 = vmatpush1.msra.mxu0 %v220
        %254 = vmatprep.subr.mxu0 %v223
        %255 = vmatpush1.msra.mxu0 %v222
        %256 = vmatprep.subr.mxu0 %v225
        %257 = vmatpush1.msra.mxu0 %v224
        %258 = vmatprep.subr.mxu0 %v227
        %259 = vmatpush1.msra.mxu0 %v226
        %260 = vmatprep.subr.mxu0 %v229
        %261 = vmatpush1.msra.mxu0 %v228
        %262 = vmatprep.subr.mxu0 %v231
        %263 = vmatpush1.msra.mxu0 %v230
        %264 = vmatprep.subr.mxu0 %v233
        %265 = vmatpush1.msra.mxu0 %v232
        %266 = vmatprep.subr.mxu0 %v235
        %267 = vmatpush1.msra.mxu0 %v234
        %268 = vmatprep.subr.mxu0 %v237
        %269 = vmatpush1.msra.mxu0 %v236
        %270 = vmatprep.subr.mxu0 %v239
        %271 = vmatpush1.msra.mxu0 %v238
        %272 = vmatprep.subr.mxu0 0.0
        %273 = vmatpush1.msra.mxu0 0.0
        %274 = vmatprep.subr.mxu0 0.0
        %275 = vmatpush1.msra.mxu0 0.0
        %276 = vmatprep.subr.mxu0 0.0
        %277 = vmatpush1.msra.mxu0 0.0
        %278 = vmatprep.subr.mxu0 0.0
        %279 = vmatpush1.msra.mxu0 0.0
        %280 = vmatprep.subr.mxu0 0.0
        %281 = vmatpush1.msra.mxu0 0.0
        %282 = vmatprep.subr.mxu0 0.0
        %283 = vmatpush1.msra.mxu0 0.0
        %284 = vmatprep.subr.mxu0 0.0
        %285 = vmatpush1.msra.mxu0 0.0
        %286 = vmatprep.subr.mxu0 0.0
        %287 = vmatpush1.msra.mxu0 0.0
        %288 = vmatprep.subr.mxu0 0.0
        %289 = vmatpush1.msra.mxu0 0.0
        %290 = vmatprep.subr.mxu0 0.0
        %291 = vmatpush1.msra.mxu0 0.0
        %292 = vmatprep.subr.mxu0 0.0
        %293 = vmatpush1.msra.mxu0 0.0
        %294 = vmatprep.subr.mxu0 0.0
        %295 = vmatpush1.msra.mxu0 0.0
        %296 = vmatprep.subr.mxu0 0.0
        %297 = vmatpush1.msra.mxu0 0.0
        %298 = vmatprep.subr.mxu0 0.0
        %299 = vmatpush1.msra.mxu0 0.0
        %300 = vmatprep.subr.mxu0 0.0
        %301 = vmatpush1.msra.mxu0 0.0
        %302 = vmatprep.subr.mxu0 0.0
        %303 = vmatpush1.msra.mxu0 0.0
        %304 = vmatprep.mubr.f32.mxu0 0.0
        %305 = vmatmul.mubr.f32.gmra.mrb[0].mxu0 %v207
        %v306 = vpop.f32.mrb[0].mxu0
        %v307 = vadd.f32 0.0, %v306
        %v308 = vpop.f32.mrb[0].mxu0
        %v309 = vadd.f32 0.0, %v308
        %310 = vdwg.mxu0
        %v311 = vadd.f32 %v205, %v307
        %v312 = vadd.f32 %v206, %v309
        %313 = vst [vmem:[%s197] sm:$0xff] %v311
        %314 = vst [vmem:[%s197 + $0x8] sm:$0xff] %v312
        %s315 = sand.u32 %s94, 1
        %s316 = scalar_lea.sflag [#allocation4], %s315
        %s317 = sand.u32 %s94, 1
        %s318 = smul.addr %s317, 16
        %s319 = scalar_lea.vmem [#allocation7], %s318
        // Predicated region
        $region41: #{tpu_custom_call.1} parent=27 // pred_check
          %p320 = pneg %p104
        $region42: #{tpu_custom_call.1} parent=27 // pred_check_branch
          %322 = sbr.rel (%p320) target = $region44
        $region43: #{tpu_custom_call.1} parent=27 // pred_region
          %s324 = ssub.s32 256, 256
          %325 = vsyncadd %s316, %s324
          %s326 = smul.addr %s24, 2
          %s327 = smul.addr %s326, 128
          %s328 = scalar_lea.hbm %s2, %s327
          %s330 = sshll.u32 %s319, 4
          %s331 = int_to_ptr.vmem [resolvable:$true] %s330
          %333 = dma.vmem_to_hbm [thread:$0]  %s331, 256, %s328, %s316
        $region44: #{tpu_custom_call.1} parent=27 // pred_fallthru
          _
      $region28: #{tpu_custom_call.1} parent=5 // pred_fallthru
        _
      %p334 = scmp.le.s32.totalorder 2, %s15
      // Predicated region
      $region45: #{tpu_custom_call.1} parent=5 // pred_check
        %p335 = pneg %p334
      $region46: #{tpu_custom_call.1} parent=5 // pred_check_branch
        %337 = sbr.rel (%p335) target = $region48
      $region47: #{tpu_custom_call.1} parent=5 // pred_region
        %s338 = ssub.s32 %s15, 2
        // Predicated region
        $region49: #{tpu_custom_call.1} parent=47 // pred_check
          %p339 = pneg %p110
        $region50: #{tpu_custom_call.1} parent=47 // pred_check_branch
          %341 = sbr.rel (%p339) target = $region52
        $region51: #{tpu_custom_call.1} parent=47 // pred_region
          %s342 = sand.u32 %s95, 1
          %s343 = scalar_lea.sflag [#allocation4], %s342
          %s344 = sand.u32 %s95, 1
          %s345 = smul.addr %s344, 16
          %s346 = scalar_lea.vmem [#allocation7], %s345
          %347 = dma.done %s343, 256
        $region52: #{tpu_custom_call.1} parent=47 // pred_fallthru
          _
      $region48: #{tpu_custom_call.1} parent=5 // pred_fallthru
        _
    $region6: #{tpu_custom_call.1} parent=1 // loop_footer
      %s19 = sadd.s32 1, %s15
    $region7: #{tpu_custom_call.1} parent=1 // loop_footer_branch
      %14 = sbr.rel target = $region3
    $region8: #{tpu_custom_call.1} parent=1 // loop_exit
      _
    %348 = vsyncpa [#allocation3], 1
    %s349 = scalar_lea.sflag [#allocation3], 1
    %350 = vsyncpa %s349, 1
    %351 = vsyncpa [#allocation6], 1
    %352 = vsyncpa [#allocation4], 1
    %s353 = scalar_lea.sflag [#allocation4], 1
    %354 = vsyncpa %s353, 1

</llo_original>
